<compile_context>
chip_gen: v7x
topology: tpu7x:2x2x1
jax: 0.10.0
libtpu: 0.0.40
codegen_flags: <defaults>
</compile_context>

<pallas_src>
import jax
import jax.numpy as jnp
from jax.experimental import pallas as pl
from jax.experimental.pallas import tpu as pltpu

_LANE = 128


def _diffor_kernel(x_ref, w1_ref, b1_ref, w2_ref, b2_ref, o_ref):
    # x_ref:  (in, TB)       lane-dense batch tile
    # w1_ref: (hidden, in)   PyTorch Linear layout (out, in) -> directly W1 @ x
    # b1_ref: (hidden, 1)
    # w2_ref: (hidden, 1)    second-layer weights as a column (VPU/XLU path)
    # b2_ref: (1, 1)         scalar bias in SMEM
    # o_ref:  (1, TB)
    h = jnp.dot(w1_ref[...], x_ref[...], preferred_element_type=jnp.float32)  # (hidden, TB)
    h = jnp.maximum(h + b1_ref[...], 0.0)                                      # bias + ReLU
    # Output projection off the MXU: elementwise mult (VPU) + sublane reduce (XLU).
    y = jnp.sum(h * w2_ref[...], axis=0, keepdims=True) + b2_ref[0, 0]         # (1, TB)
    o_ref[...] = jax.nn.sigmoid(y).astype(o_ref.dtype)


def _pick_batch_tile(batch, max_tb=16384):
    """Lane-aligned batch tile.

    Small/medium batches get a single tile (no per-step pipeline overhead).
    Large batches get an EVEN number of big tiles so the "parallel" grid axis
    can be sharded across v7x's two TensorCores, with the tile capped
    (default 16384) to stay comfortably inside v5e's 16 MiB scoped VMEM.
    """
    max_tb = max(_LANE, (max_tb // _LANE) * _LANE)
    lanes = pl.cdiv(batch, _LANE) * _LANE
    if lanes <= max_tb:
        return lanes
    n_tiles = pl.cdiv(lanes, max_tb)
    if n_tiles % 2:
        n_tiles += 1
    return pl.cdiv(pl.cdiv(lanes, n_tiles), _LANE) * _LANE


def diffor_forward(x, w1, b1, w2, b2, *, max_tb=16384):
    """Forward pass of DiffOR.

    x:  (B, in_features)           activations, PyTorch row-major
    w1: (hidden, in_features)      nn.Linear weight layout (out, in)
    b1: (hidden,)
    w2: (1, hidden)                nn.Linear weight layout (out, in)
    b2: (1,)
    returns (B, 1) float32
    """
    B, in_features = x.shape
    hidden = w1.shape[0]

    tb = _pick_batch_tile(B, max_tb)
    num_tiles = pl.cdiv(B, tb)

    # Lane-dense batch layout: present x as (in_features, B). This is a tiny
    # (B*in*4 bytes) transpose; no zero-padded (in, b_pad) copy is made --
    # Pallas's ragged last block handles B % tb.
    # TODO(synk): have the producer emit x already as (in_features, B) to drop
    # this transpose entirely.
    x_t = x.T

    b1_col = b1.reshape(hidden, 1)
    w2_col = w2.reshape(hidden, 1)
    b2_s = b2.reshape(1, 1)

    cost = pl.CostEstimate(
        flops=2 * B * hidden * (in_features + 1) + 4 * B * hidden,
        transcendentals=B,                                   # one sigmoid per row
        bytes_accessed=4 * (B * (in_features + 1)            # x in, y out
                            + hidden * (in_features + 2) + 1),  # weights/biases
    )

    out_t = pl.pallas_call(
        _diffor_kernel,
        out_shape=jax.ShapeDtypeStruct((1, B), jnp.float32),
        grid=(num_tiles,),
        in_specs=[
            # streamed, batch-tiled input (lane-dense, ragged last block OK)
            pl.BlockSpec((in_features, tb), lambda i: (0, i)),
            # weights / biases stay resident across the batch grid
            pl.BlockSpec((hidden, in_features), lambda i: (0, 0)),
            pl.BlockSpec((hidden, 1), lambda i: (0, 0)),
            pl.BlockSpec((hidden, 1), lambda i: (0, 0)),
            # scalar output bias in SMEM (no padded VMEM tile / vreg wasted)
            pl.BlockSpec((1, 1), lambda i: (0, 0),
                         memory_space=pltpu.MemorySpace.SMEM),
        ],
        out_specs=pl.BlockSpec((1, tb), lambda i: (0, i)),
        compiler_params=pltpu.CompilerParams(
            dimension_semantics=("parallel",)),   # shards tiles across v7x's 2 TCs
        cost_estimate=cost,
    )(x_t, w1, b1_col, w2_col, b2_s)

    return out_t.reshape(B, 1)


def init_params(key, input_size=3, hidden_size=32):
    """Deterministic init mimicking PyTorch nn.Linear (uniform +/- 1/sqrt(fan_in)),
    stored in PyTorch's native (out_features, in_features) layout."""
    k1, k2, k3, k4 = jax.random.split(key, 4)
    lim1 = 1.0 / jnp.sqrt(jnp.float32(input_size))
    lim2 = 1.0 / jnp.sqrt(jnp.float32(hidden_size))
    w1 = jax.random.uniform(k1, (hidden_size, input_size), jnp.float32, -lim1, lim1)
    b1 = jax.random.uniform(k2, (hidden_size,), jnp.float32, -lim1, lim1)
    w2 = jax.random.uniform(k3, (1, hidden_size), jnp.float32, -lim2, lim2)
    b2 = jax.random.uniform(k4, (1,), jnp.float32, -lim2, lim2)
    return w1, b1, w2, b2


if __name__ == "__main__":
    key = jax.random.PRNGKey(0)
    kx, kx2, kp = jax.random.split(key, 3)

    input_size, hidden_size = 3, 32
    w1, b1, w2, b2 = init_params(kp, input_size, hidden_size)

    def ref(x):
        # PyTorch semantics: sigmoid(relu(x @ W1.T + b1) @ W2.T + b2)
        return jax.nn.sigmoid(jnp.maximum(x @ w1.T + b1, 0.0) @ w2.T + b2)

    # Small batch: single (ragged) tile.
    x = jax.random.uniform(kx, (8, input_size), jnp.float32)   # "proba_tensor"
    out = jax.block_until_ready(diffor_forward(x, w1, b1, w2, b2))
    assert out.shape == (8, 1)
    assert jnp.allclose(out, ref(x), atol=1e-5, rtol=1e-5)

    # Medium batch with a tiny tile cap: exercises the multi-tile grid and the
    # ragged last block on both input and output.
    x2 = jax.random.uniform(kx2, (300, input_size), jnp.float32)
    out2 = jax.block_until_ready(diffor_forward(x2, w1, b1, w2, b2, max_tb=128))
    assert out2.shape == (300, 1)
    assert jnp.allclose(out2, ref(x2), atol=1e-5, rtol=1e-5)

    print("KERNEL_OK")
</pallas_src>

<mosaic_0001>
module attributes {stable_mosaic.version = 11 : i64} {
  func.func @_diffor_kernel(%arg0: i32, %arg1: memref<3x128xf32, #tpu.memory_space<vmem>>, %arg2: memref<32x3xf32, #tpu.memory_space<vmem>>, %arg3: memref<32x1xf32, #tpu.memory_space<vmem>>, %arg4: memref<32x1xf32, #tpu.memory_space<vmem>>, %arg5: memref<1x1xf32, #tpu.memory_space<smem>>, %arg6: memref<1x128xf32, #tpu.memory_space<vmem>>) attributes {dimension_semantics = [#tpu.dimension_semantics<parallel>], iteration_bounds = array<i64: 1>, scalar_prefetch = 0 : i64, scratch_operands = 0 : i64, tpu.core_type = #tpu.core_type<tc>, window_params = [{transform_indices = @transform_0, window_bounds = array<i64: 3, 128>}, {pipeline_mode = #tpu.pipeline_mode<synchronous>, transform_indices = @transform_1, window_bounds = array<i64: 32, 3>}, {pipeline_mode = #tpu.pipeline_mode<synchronous>, transform_indices = @transform_2, window_bounds = array<i64: 32, 1>}, {pipeline_mode = #tpu.pipeline_mode<synchronous>, transform_indices = @transform_3, window_bounds = array<i64: 32, 1>}, {transform_indices = @transform_4, window_bounds = array<i64: 1, 1>}, {transform_indices = @transform_5, window_bounds = array<i64: 1, 128>}]} {
    %c0 = arith.constant 0 : index
    %c0_0 = arith.constant 0 : index
    %0 = vector.load %arg2[%c0, %c0_0] : memref<32x3xf32, #tpu.memory_space<vmem>>, vector<32x3xf32>
    %c0_1 = arith.constant 0 : index
    %c0_2 = arith.constant 0 : index
    %1 = vector.load %arg1[%c0_1, %c0_2] : memref<3x128xf32, #tpu.memory_space<vmem>>, vector<3x128xf32>
    %cst = arith.constant dense<0.000000e+00> : vector<32x128xf32>
    %2 = tpu.matmul %0, %1, %cst {dimension_numbers = #tpu.dot_dimension_numbers<[1], [0], [0], [1], [0, 0, 1, 1], [], []>} : vector<32x3xf32>, vector<3x128xf32>, vector<32x128xf32> -> vector<32x128xf32>
    %c0_3 = arith.constant 0 : index
    %c0_4 = arith.constant 0 : index
    %3 = vector.load %arg3[%c0_3, %c0_4] : memref<32x1xf32, #tpu.memory_space<vmem>>, vector<32x1xf32>
    %4 = vector.broadcast %3 : vector<32x1xf32> to vector<32x128xf32>
    %5 = arith.addf %2, %4 : vector<32x128xf32>
    %cst_5 = arith.constant 0.000000e+00 : f32
    %6 = vector.broadcast %cst_5 : f32 to vector<32x128xf32>
    %7 = arith.maximumf %5, %6 : vector<32x128xf32>
    %c0_6 = arith.constant 0 : index
    %c0_7 = arith.constant 0 : index
    %8 = vector.load %arg4[%c0_6, %c0_7] : memref<32x1xf32, #tpu.memory_space<vmem>>, vector<32x1xf32>
    %9 = vector.broadcast %8 : vector<32x1xf32> to vector<32x128xf32>
    %10 = arith.mulf %7, %9 : vector<32x128xf32>
    %cst_8 = arith.constant dense<0.000000e+00> : vector<128xf32>
    %11 = vector.multi_reduction <add>, %10, %cst_8 [0] : vector<32x128xf32> to vector<128xf32>
    %12 = vector.shape_cast %11 : vector<128xf32> to vector<1x128xf32>
    %c0_9 = arith.constant 0 : index
    %c0_10 = arith.constant 0 : index
    %13 = memref.load %arg5[%c0_9, %c0_10] : memref<1x1xf32, #tpu.memory_space<smem>>
    %14 = vector.broadcast %13 : f32 to vector<1x128xf32>
    %15 = arith.addf %12, %14 : vector<1x128xf32>
    %16 = arith.negf %15 : vector<1x128xf32>
    %17 = math.exp %16 : vector<1x128xf32>
    %cst_11 = arith.constant 1.000000e+00 : f32
    %18 = vector.broadcast %cst_11 : f32 to vector<1x128xf32>
    %19 = arith.addf %18, %17 : vector<1x128xf32>
    %20 = arith.divf %18, %19 : vector<1x128xf32>
    %c0_12 = arith.constant 0 : index
    %c0_13 = arith.constant 0 : index
    %21 = vector.load %arg6[%c0_12, %c0_13] : memref<1x128xf32, #tpu.memory_space<vmem>>, vector<1x128xf32>
    tpu.vector_store %arg6[%c0_12, %c0_13], %20 {strides = array<i32>} : memref<1x128xf32, #tpu.memory_space<vmem>>, vector<1x128xf32>,
    return
  }
  func.func @transform_0(%arg0: i32) -> (i32, i32) {
    %c0_i32 = arith.constant 0 : i32
    %c0_i32_0 = arith.constant 0 : i32
    return %c0_i32, %arg0 : i32, i32
  }
  func.func @transform_1(%arg0: i32) -> (i32, i32) {
    %c0_i32 = arith.constant 0 : i32
    %c0_i32_0 = arith.constant 0 : i32
    %c0_i32_1 = arith.constant 0 : i32
    return %c0_i32, %c0_i32_0 : i32, i32
  }
  func.func @transform_2(%arg0: i32) -> (i32, i32) {
    %c0_i32 = arith.constant 0 : i32
    %c0_i32_0 = arith.constant 0 : i32
    %c0_i32_1 = arith.constant 0 : i32
    return %c0_i32, %c0_i32_0 : i32, i32
  }
  func.func @transform_3(%arg0: i32) -> (i32, i32) {
    %c0_i32 = arith.constant 0 : i32
    %c0_i32_0 = arith.constant 0 : i32
    %c0_i32_1 = arith.constant 0 : i32
    return %c0_i32, %c0_i32_0 : i32, i32
  }
  func.func @transform_4(%arg0: i32) -> (i32, i32) {
    %c0_i32 = arith.constant 0 : i32
    %c0_i32_0 = arith.constant 0 : i32
    %c0_i32_1 = arith.constant 0 : i32
    return %c0_i32, %c0_i32_0 : i32, i32
  }
  func.func @transform_5(%arg0: i32) -> (i32, i32) {
    %c0_i32 = arith.constant 0 : i32
    %c0_i32_0 = arith.constant 0 : i32
    return %c0_i32, %arg0 : i32, i32
  }
}

</mosaic_0001>

<llo_original>
// kernel: tpu_custom_call.1
$region0: #{tpu_custom_call.1}
  #allocation0 [shape = 'u32[]', space=smem, size = 0x4, offset = 0x4, fixed_abs, tag = 'smem constant byte address 0x4 - core index']
  #allocation1 [shape = 'u32[144,128]{1,0:T(1,128)}', space=vmem, size = 0x12000, scoped, tag = 'internal scratch']
  #allocation2 [shape = 'f32[1,1]{1,0:T(1,128)S(6)}', space=smem, size = 0x200, scoped, tag = 'scoped memory for tpu_custom_call.1']
  %s0 = inlined_call_operand.vmem [shape: f32[3,8], index: 0, kind: input, shape index: {}]
  %s1 = inlined_call_operand.vmem [shape: f32[32,3], index: 1, kind: input, shape index: {}]
  %s2 = inlined_call_operand.vmem [shape: f32[32,1], index: 2, kind: input, shape index: {}]
  %s3 = inlined_call_operand.vmem [shape: f32[32,1], index: 3, kind: input, shape index: {}]
  %s4 = inlined_call_operand.<no memory space> [shape: f32[1,1], index: 4, kind: input, shape index: {}]
  %s5 = inlined_call_operand.hbm [shape: f32[1,8], index: 5, kind: output, shape index: {}]
  %s6 = sld [smem:[#allocation0]]
  $region30: #{tpu_custom_call.1} parent=0
    _
  %s8 = ssub.s32 1, %s6
  %s9 = scalar_select 0, %s8, %s6
  %10 = sst [smem:[#allocation2]] %s4
  $region1: #{tpu_custom_call.1} parent=0
    #allocation3 [shape = 'u8[512]{0}', space=vmem, size = 0x400, scoped, tag = 'output window, operand 0, single buffered']
    #allocation4 [shape = 's32[1]{0}', space=sflag, size = 0x4, scoped, tag = 'scoped memory for tpu_custom_call.1']
    %11 = vsyncpa [#allocation4], 0
    // Predicated region
    $region2: #{tpu_custom_call.1} parent=1 // pred_check
      _
    $region3: #{tpu_custom_call.1} parent=1 // pred_check_branch
      %13 = sbr.rel (0) target = $region5
    $region4: #{tpu_custom_call.1} parent=1 // pred_region
      _
    $region5: #{tpu_custom_call.1} parent=1 // pred_fallthru
      _
    // Predicated region
    $region6: #{tpu_custom_call.1} parent=1 // pred_check
      _
    $region7: #{tpu_custom_call.1} parent=1 // pred_check_branch
      %15 = sbr.rel (0) target = $region9
    $region8: #{tpu_custom_call.1} parent=1 // pred_region
      _
    $region9: #{tpu_custom_call.1} parent=1 // pred_fallthru
      _
    // Predicated region
    $region10: #{tpu_custom_call.1} parent=1 // pred_check
      _
    $region11: #{tpu_custom_call.1} parent=1 // pred_check_branch
      %17 = sbr.rel (0) target = $region13
    $region12: #{tpu_custom_call.1} parent=1 // pred_region
      _
    $region13: #{tpu_custom_call.1} parent=1 // pred_fallthru
      _
    // Predicated region
    $region14: #{tpu_custom_call.1} parent=1 // pred_check
      _
    $region15: #{tpu_custom_call.1} parent=1 // pred_check_branch
      %19 = sbr.rel (0) target = $region17
    $region16: #{tpu_custom_call.1} parent=1 // pred_region
      _
    $region17: #{tpu_custom_call.1} parent=1 // pred_fallthru
      _
    // Predicated region
    $region18: #{tpu_custom_call.1} parent=1 // pred_check
      _
    $region19: #{tpu_custom_call.1} parent=1 // pred_check_branch
      %21 = sbr.rel (0) target = $region21
    $region20: #{tpu_custom_call.1} parent=1 // pred_region
      _
    $region21: #{tpu_custom_call.1} parent=1 // pred_fallthru
      _
    %v22 = vld [vmem:[%s1] sm:$0xff]
    %v23 = vld [vmem:[%s1 + $0x8] sm:$0xff]
    %v24 = vld [vmem:[%s1 + $0x10] sm:$0xff]
    %v25 = vld [vmem:[%s1 + $0x18] sm:$0xff]
    %v26 = vld [vmem:[%s0] sm:$0x7]
    %v27 = vld [vmem:[%s2] sm:$0xff]
    %v28 = vld [vmem:[%s2 + $0x8] sm:$0xff]
    %v29 = vld [vmem:[%s2 + $0x10] sm:$0xff]
    %v30 = vld [vmem:[%s2 + $0x18] sm:$0xff]
    %32 = vset.pattern.permute.xlu0 0
    %33 = vperm.xlu0 %32, %v27
    %v34 = vpop.permute.xlu0 %33
    %37 = vset.pattern.permute.xlu0 0
    %38 = vperm.xlu0 %37, %v28
    %v39 = vpop.permute.xlu0 %38
    %42 = vset.pattern.permute.xlu0 0
    %43 = vperm.xlu0 %42, %v29
    %v44 = vpop.permute.xlu0 %43
    %47 = vset.pattern.permute.xlu0 0
    %48 = vperm.xlu0 %47, %v30
    %v49 = vpop.permute.xlu0 %48
    %vm51 = vcmask 23552
    %v53 = vsel %vm51, %v22, 0
    %v56 = vsel %vm51, %v23, 0
    %v59 = vsel %vm51, %v24, 0
    %v62 = vsel %vm51, %v25, 0
    %vm64 = vcmask 1042432
    %v66 = vsel %vm64, %v26, 0
    %68 = vmatprep.subr.mxu0 0.0
    %69 = vmatpush1.msra.mxu0 %v66
    %70 = vmatprep.subr.mxu0 0.0
    %71 = vmatpush1.msra.mxu0 0.0
    %72 = vmatprep.subr.mxu0 0.0
    %73 = vmatpush1.msra.mxu0 0.0
    %74 = vmatprep.subr.mxu0 0.0
    %75 = vmatpush1.msra.mxu0 0.0
    %76 = vmatprep.subr.mxu0 0.0
    %77 = vmatpush1.msra.mxu0 0.0
    %78 = vmatprep.subr.mxu0 0.0
    %79 = vmatpush1.msra.mxu0 0.0
    %80 = vmatprep.subr.mxu0 0.0
    %81 = vmatpush1.msra.mxu0 0.0
    %82 = vmatprep.subr.mxu0 0.0
    %83 = vmatpush1.msra.mxu0 0.0
    %84 = vmatprep.subr.mxu0 0.0
    %85 = vmatpush1.msra.mxu0 0.0
    %86 = vmatprep.subr.mxu0 0.0
    %87 = vmatpush1.msra.mxu0 0.0
    %88 = vmatprep.subr.mxu0 0.0
    %89 = vmatpush1.msra.mxu0 0.0
    %90 = vmatprep.subr.mxu0 0.0
    %91 = vmatpush1.msra.mxu0 0.0
    %92 = vmatprep.subr.mxu0 0.0
    %93 = vmatpush1.msra.mxu0 0.0
    %94 = vmatprep.subr.mxu0 0.0
    %95 = vmatpush1.msra.mxu0 0.0
    %96 = vmatprep.subr.mxu0 0.0
    %97 = vmatpush1.msra.mxu0 0.0
    %98 = vmatprep.subr.mxu0 0.0
    %99 = vmatpush1.msra.mxu0 0.0
    %100 = vmatprep.subr.mxu0 0.0
    %101 = vmatpush1.msra.mxu0 0.0
    %102 = vmatprep.subr.mxu0 0.0
    %103 = vmatpush1.msra.mxu0 0.0
    %104 = vmatprep.subr.mxu0 0.0
    %105 = vmatpush1.msra.mxu0 0.0
    %106 = vmatprep.subr.mxu0 0.0
    %107 = vmatpush1.msra.mxu0 0.0
    %108 = vmatprep.subr.mxu0 0.0
    %109 = vmatpush1.msra.mxu0 0.0
    %110 = vmatprep.subr.mxu0 0.0
    %111 = vmatpush1.msra.mxu0 0.0
    %112 = vmatprep.subr.mxu0 0.0
    %113 = vmatpush1.msra.mxu0 0.0
    %114 = vmatprep.subr.mxu0 0.0
    %115 = vmatpush1.msra.mxu0 0.0
    %116 = vmatprep.subr.mxu0 0.0
    %117 = vmatpush1.msra.mxu0 0.0
    %118 = vmatprep.subr.mxu0 0.0
    %119 = vmatpush1.msra.mxu0 0.0
    %120 = vmatprep.subr.mxu0 0.0
    %121 = vmatpush1.msra.mxu0 0.0
    %122 = vmatprep.subr.mxu0 0.0
    %123 = vmatpush1.msra.mxu0 0.0
    %124 = vmatprep.subr.mxu0 0.0
    %125 = vmatpush1.msra.mxu0 0.0
    %126 = vmatprep.subr.mxu0 0.0
    %127 = vmatpush1.msra.mxu0 0.0
    %128 = vmatprep.subr.mxu0 0.0
    %129 = vmatpush1.msra.mxu0 0.0
    %130 = vmatprep.subr.mxu0 0.0
    %131 = vmatpush1.msra.mxu0 0.0
    %132 = vmatprep.mubr.f32.mxu0 0.0
    %133 = vmatmul.mubr.f32.gmra.mrb[0].mxu0 %v53
    %v134 = vpop.f32.mrb[0].mxu0
    %v135 = vadd.f32 %v34, %v134
    %v136 = vpop.f32.mrb[0].mxu0
    %137 = vmatprep.mubr.f32.mxu0 0.0
    %138 = vmatmul.mubr.f32.gmra.mrb[0].mxu0 %v56
    %v139 = vpop.f32.mrb[0].mxu0
    %v140 = vadd.f32 %v39, %v139
    %v141 = vpop.f32.mrb[0].mxu0
    %142 = vmatprep.mubr.f32.mxu0 0.0
    %143 = vmatmul.mubr.f32.gmra.mrb[0].mxu0 %v59
    %v144 = vpop.f32.mrb[0].mxu0
    %v145 = vadd.f32 %v44, %v144
    %v146 = vpop.f32.mrb[0].mxu0
    %147 = vmatprep.mubr.f32.mxu0 0.0
    %148 = vmatmul.mubr.f32.gmra.mrb[0].mxu0 %v62
    %v149 = vpop.f32.mrb[0].mxu0
    %v150 = vadd.f32 %v49, %v149
    %v151 = vpop.f32.mrb[0].mxu0
    %152 = vdwg.mxu0
    %v153 = vmax.f32 %v135, 0.0
    %v154 = vmax.f32 %v140, 0.0
    %v155 = vmax.f32 %v145, 0.0
    %v156 = vmax.f32 %v150, 0.0
    %v157 = vld [vmem:[%s3] sm:$0xff]
    %v158 = vld [vmem:[%s3 + $0x8] sm:$0xff]
    %v159 = vld [vmem:[%s3 + $0x10] sm:$0xff]
    %v160 = vld [vmem:[%s3 + $0x18] sm:$0xff]
    %162 = vset.pattern.permute.xlu0 0
    %163 = vperm.xlu0 %162, %v157
    %v164 = vpop.permute.xlu0 %163
    %167 = vset.pattern.permute.xlu0 0
    %168 = vperm.xlu0 %167, %v158
    %v169 = vpop.permute.xlu0 %168
    %172 = vset.pattern.permute.xlu0 0
    %173 = vperm.xlu0 %172, %v159
    %v174 = vpop.permute.xlu0 %173
    %177 = vset.pattern.permute.xlu0 0
    %178 = vperm.xlu0 %177, %v160
    %v179 = vpop.permute.xlu0 %178
    %v181 = vmul.f32 %v153, %v164
    %v182 = vmul.f32 %v154, %v169
    %v183 = vmul.f32 %v155, %v174
    %v184 = vmul.f32 %v156, %v179
    %v185 = vadd.f32 %v181, %v182
    %v186 = vadd.f32 %v185, %v183
    %v187 = vadd.f32 %v186, %v184
    %v188 = vrot.slane %v187, 4
    %v189 = vadd.f32 %v187, %v188
    %v190 = vrot.slane %v189, 2
    %v191 = vadd.f32 %v189, %v190
    %v192 = vrot.slane %v191, 1
    %v193 = vadd.f32 %v191, %v192
    %s194 = sld [smem:[#allocation2]]
    %v195 = vstv %s194
    %v196 = vadd.f32 %v193, %v195
    %v197 = vxor.u32 %v196, 2147483648
    %v198 = vmul.f32 %v197, 1.442695
    %v199 = vpow.pop %v198
    %v200 = vadd.f32 %v199, 1.0
    %v201 = vrcp.pop %v200
    %v202 = vmul.f32 1.0, %v201
    %203 = vst [vmem:[#allocation3] sm:$0x1] %v202
    // Predicated region
    $region22: #{tpu_custom_call.1} parent=1 // pred_check
      _
    $region23: #{tpu_custom_call.1} parent=1 // pred_check_branch
      %205 = sbr.rel (0) target = $region25
    $region24: #{tpu_custom_call.1} parent=1 // pred_region
      %s207 = ssub.s32 16, 16
      %208 = vsyncadd [#allocation4], %s207
      %s210 = sshll.u32 [#allocation3], 4
      %s211 = int_to_ptr.vmem [resolvable:$true] %s210
      %213 = dma.vmem_to_hbm [thread:$0]  %s211, 16, %s5, [#allocation4]
    $region25: #{tpu_custom_call.1} parent=1 // pred_fallthru
      _
    // Predicated region
    $region26: #{tpu_custom_call.1} parent=1 // pred_check
      _
    $region27: #{tpu_custom_call.1} parent=1 // pred_check_branch
      %215 = sbr.rel (0) target = $region29
    $region28: #{tpu_custom_call.1} parent=1 // pred_region
      %216 = dma.done [#allocation4], 16
    $region29: #{tpu_custom_call.1} parent=1 // pred_fallthru
      _
    %217 = vsyncpa [#allocation4], 1

</llo_original>
